<compile_context>
chip_gen: v7x
topology: tpu7x:2x2x1
jax: 0.10.0
libtpu: 0.0.40
codegen_flags: <defaults>
</compile_context>

<pallas_src>
import math

import jax
import jax.numpy as jnp
from jax import lax
from jax.experimental import pallas as pl
from jax.experimental.pallas import tpu as pltpu


def _gqa_kernel(x_ref, wq_ref, bq_ref, wk_ref, bk_ref, wv_ref, bv_ref,
                wp_ref, bp_ref, cos_ref, sin_ref, out_ref):
    """One grid step = (one batch tile, one kv head)."""
    f32, bf16 = jnp.float32, jnp.bfloat16
    bb, T, C = x_ref.shape
    head_dim = wq_ref.shape[2]
    half = head_dim // 2
    h = pl.program_id(1)

    x = x_ref[...].reshape(bb * T, C)                 # bf16; leading-dim merge (free)

    # Per-head Q/K/V projections: full-depth MXU matmuls, bf16 in / f32 acc.
    # wq is pre group-summed, RoPE-permuted ([even|odd]) and pre-scaled by
    # 1/sqrt(head_dim); wk is RoPE-permuted; wv/wp are in natural order.
    q = jnp.dot(x, wq_ref[0], preferred_element_type=f32) + bq_ref[0]   # (bb*T, hd)
    k = jnp.dot(x, wk_ref[0], preferred_element_type=f32) + bk_ref[0]
    v = (jnp.dot(x, wv_ref[0], preferred_element_type=f32) + bv_ref[0]).astype(bf16)

    # RoPE tables arrive as (T, half); tile over the bb rows once (hoisted).
    cos = jnp.tile(cos_ref[...], (bb, 1))             # (bb*T, half)
    sin = jnp.tile(sin_ref[...], (bb, 1))

    def rope(t):                                      # pure VPU mul/add + one lane concat
        e, o = t[:, :half], t[:, half:]
        return jnp.concatenate([e * cos - o * sin, e * sin + o * cos], axis=-1)

    q = rope(q).astype(bf16).reshape(bb, T, head_dim)
    k = rope(k).astype(bf16).reshape(bb, T, head_dim)
    v = v.reshape(bb, T, head_dim)

    # Single full-depth QK^T per head, batched over the bb rows of this tile
    # (scale already folded into wq/bq).
    s = jnp.einsum('bqd,bkd->bqk', q, k, preferred_element_type=f32)    # (bb, T, T)

    row = lax.broadcasted_iota(jnp.int32, (T, T), 0)
    col = lax.broadcasted_iota(jnp.int32, (T, T), 1)
    s = jnp.where((col <= row)[None], s, jnp.float32(-1e30))            # causal mask
    s = s - jnp.max(s, axis=-1, keepdims=True)
    p = jnp.exp(s)
    p = p * pl.reciprocal(jnp.sum(p, axis=-1, keepdims=True), approx=True)

    y = jnp.einsum('bqk,bkd->bqd', p.astype(bf16), v,
                   preferred_element_type=f32)                          # (bb, T, hd)

    # Per-head slice of the output projection; accumulate into the resident
    # f32 output block (head axis is the innermost, "arbitrary" grid axis).
    part = jnp.dot(y.reshape(bb * T, head_dim).astype(bf16), wp_ref[0],
                   preferred_element_type=f32).reshape(bb, T, C)

    @pl.when(h == 0)
    def _():
        out_ref[...] = part + bp_ref[...]

    @pl.when(h != 0)
    def _():
        out_ref[...] = out_ref[...] + part


def grouped_query_attention(x, params, *, n_query_head, n_kv_head, base=10000,
                            batch_block=None):
    B, T, C = x.shape
    assert n_query_head % n_kv_head == 0 and C % n_query_head == 0
    n_group = n_query_head // n_kv_head
    head_dim = C // n_query_head
    half = head_dim // 2
    H = n_kv_head
    assert head_dim % 2 == 0

    f32, bf16 = jnp.float32, jnp.bfloat16
    wq, bq, wk, bk, wv, bv, wp, bp = params

    # ---------------- weight-side folds (exact algebra, zero runtime cost) ---
    scale = 1.0 / math.sqrt(head_dim)
    perm = jnp.concatenate([jnp.arange(half) * 2, jnp.arange(half) * 2 + 1])  # [evens|odds]

    # Fold the pre-softmax query group-sum of this module into the Q weights,
    # fold the score scale, apply the per-head RoPE permutation, and lay every
    # weight out head-major (leading head dim -> BlockSpec slicing, no lane
    # offsets in the kernel).
    wq_g = wq.reshape(C, H, n_group, head_dim).sum(axis=2)                    # (C, H, hd)
    bq_g = bq.reshape(H, n_group, head_dim).sum(axis=1)                       # (H, hd)
    wq_p = (wq_g[:, :, perm] * scale).transpose(1, 0, 2).astype(bf16)         # (H, C, hd)
    bq_p = (bq_g[:, perm] * scale)[:, None, :].astype(f32)                    # (H, 1, hd)
    wk_p = wk.reshape(C, H, head_dim)[:, :, perm].transpose(1, 0, 2).astype(bf16)
    bk_p = bk.reshape(H, head_dim)[:, perm][:, None, :].astype(f32)
    wv_h = wv.reshape(C, H, head_dim).transpose(1, 0, 2).astype(bf16)         # (H, C, hd)
    bv_h = bv.reshape(H, head_dim)[:, None, :].astype(f32)
    wp_h = wp.reshape(H, head_dim, C).astype(bf16)                            # (H, hd, C)
    bp_r = bp.reshape(1, 1, C).astype(f32)

    # RoPE tables: (T, half) only — not tiled over batch or heads in HBM.
    inv_freq = 1.0 / (base ** ((jnp.arange(1, half + 1, dtype=f32) - 1.0)
                               * 2.0 / head_dim))
    emb = jnp.arange(T, dtype=f32)[:, None] * inv_freq[None, :]
    cos_t = jnp.cos(emb).astype(f32)
    sin_t = jnp.sin(emb).astype(f32)

    x_b = x.astype(bf16)   # bf16 activations at the boundary (halves HBM reads)

    # ------------- batch tile size: VMEM-budget driven, >=2 parallel steps ---
    if batch_block is None:
        try:
            vmem_cap = int(pltpu.get_tpu_info().vmem_capacity_bytes)
        except Exception:
            vmem_cap = 64 * 1024 * 1024
        budget = vmem_cap // 4                       # headroom for buffers/compiler
        per_row = T * C * (2 * 2 + 2 * 4) + T * (4 * head_dim + 2 * T + C) * 4
        max_bb = max(1, min(B, budget // max(per_row, 1)))
        if B >= 2:
            max_bb = min(max_bb, B // 2)             # keep >=2 parallel grid steps (v7x)
        batch_block = next(c for c in range(max_bb, 0, -1) if B % c == 0)
    bb = batch_block
    assert B % bb == 0

    in_specs = [
        pl.BlockSpec((bb, T, C), lambda i, h: (i, 0, 0)),            # x
        pl.BlockSpec((1, C, head_dim), lambda i, h: (h, 0, 0)),      # wq
        pl.BlockSpec((1, 1, head_dim), lambda i, h: (h, 0, 0)),      # bq
        pl.BlockSpec((1, C, head_dim), lambda i, h: (h, 0, 0)),      # wk
        pl.BlockSpec((1, 1, head_dim), lambda i, h: (h, 0, 0)),      # bk
        pl.BlockSpec((1, C, head_dim), lambda i, h: (h, 0, 0)),      # wv
        pl.BlockSpec((1, 1, head_dim), lambda i, h: (h, 0, 0)),      # bv
        pl.BlockSpec((1, head_dim, C), lambda i, h: (h, 0, 0)),      # wp
        pl.BlockSpec((1, 1, C), lambda i, h: (0, 0, 0)),             # bp
        pl.BlockSpec((T, half), lambda i, h: (0, 0)),                # cos
        pl.BlockSpec((T, half), lambda i, h: (0, 0)),                # sin
    ]
    out_spec = pl.BlockSpec((bb, T, C), lambda i, h: (i, 0, 0))

    # VMEM limit sized from the real per-step footprint, with headroom for the
    # double-buffered pipeline and in-kernel intermediates.
    blk_bytes = (bb * T * C * (2 + 4)
                 + (3 * C * head_dim + head_dim * C) * 2
                 + (3 * head_dim + C) * 4
                 + 2 * T * half * 4)
    vmem_limit = int(min(64 * 2 ** 20, max(4 * 2 ** 20, 8 * blk_bytes)))

    out = pl.pallas_call(
        _gqa_kernel,
        out_shape=jax.ShapeDtypeStruct((B, T, C), f32),
        grid_spec=pltpu.PrefetchScalarGridSpec(
            num_scalar_prefetch=0,
            grid=(B // bb, H),
            in_specs=in_specs,
            out_specs=out_spec,
        ),
        compiler_params=pltpu.CompilerParams(
            dimension_semantics=("parallel", "arbitrary"),
            vmem_limit_bytes=vmem_limit),
    )(x_b, wq_p, bq_p, wk_p, bk_p, wv_h, bv_h, wp_h, bp_r, cos_t, sin_t)

    # second return value of the torch module is a CUDA memory delta -> 0 on TPU
    return out, 0


def _reference(x, params, *, n_query_head, n_kv_head, base=10000):
    """Pure-JAX (f32) mirror of the PyTorch forward (eval mode) for verification."""
    wq, bq, wk, bk, wv, bv, wp, bp = params
    B, T, C = x.shape
    n_group = n_query_head // n_kv_head
    hd = C // n_query_head

    q = x @ wq + bq
    k = x @ wk + bk
    v = x @ wv + bv
    k = k.reshape(B, T, n_kv_head, hd).transpose(0, 2, 1, 3)
    v = v.reshape(B, T, n_kv_head, hd).transpose(0, 2, 1, 3)
    q = q.reshape(B, T, n_query_head, hd).transpose(0, 2, 1, 3)

    pos_enc = 1.0 / (base ** ((jnp.arange(1, hd // 2 + 1, dtype=jnp.float32) - 1.0)
                              * 2.0 / hd))
    emb = jnp.arange(T, dtype=jnp.float32)[:, None] * pos_enc[None, :]
    cos = jnp.cos(emb)[None, None]
    sin = jnp.sin(emb)[None, None]

    def rope(z):
        z1, z2 = z[..., 0::2], z[..., 1::2]
        return jnp.concatenate([z1 * cos - z2 * sin, z1 * sin + z2 * cos], axis=-1)

    q = rope(q)
    k = rope(k)
    q = q.reshape(B, n_kv_head, n_group, T, hd).transpose(0, 2, 1, 3, 4)  # b g h n d
    scores = jnp.einsum('bghnd,bhsd->bhns', q, k)            # sums g (module semantics)
    att = scores / math.sqrt(hd)
    mask = jnp.tril(jnp.ones((T, T)))
    att = jnp.where(mask == 0, -jnp.inf, att)
    att = jax.nn.softmax(att, axis=-1)
    y = att @ v
    y = y.transpose(0, 2, 1, 3).reshape(B, T, C // n_group)
    return y @ wp + bp


if __name__ == "__main__":
    # config: n_embd=64, n_query_head=4, n_kv_head=2, block_size=8, rope=True,
    # attn_pdrop=resid_pdrop=0 (eval)
    B, T = 2, 8
    n_embd, n_query_head, n_kv_head = 64, 4, 2
    n_group = n_query_head // n_kv_head
    c_kv = n_embd // n_group

    key = jax.random.PRNGKey(0)
    ks = jax.random.split(key, 9)

    def linear_init(kw, kb, fan_in, fan_out):
        bound = 1.0 / math.sqrt(fan_in)
        w = jax.random.uniform(kw, (fan_in, fan_out), jnp.float32, -bound, bound)
        b = jax.random.uniform(kb, (fan_out,), jnp.float32, -bound, bound)
        return w, b

    wq, bq = linear_init(ks[0], ks[1], n_embd, n_embd)
    wk, bk = linear_init(ks[2], ks[3], n_embd, c_kv)
    wv, bv = linear_init(ks[4], ks[5], n_embd, c_kv)
    wp, bp = linear_init(ks[6], ks[7], c_kv, n_embd)
    x = jax.random.normal(ks[8], (B, T, n_embd), jnp.float32)
    params = (wq, bq, wk, bk, wv, bv, wp, bp)

    y, mem_delta = grouped_query_attention(
        x, params, n_query_head=n_query_head, n_kv_head=n_kv_head)
    y = jax.block_until_ready(y)

    y_ref = _reference(x, params, n_query_head=n_query_head, n_kv_head=n_kv_head)
    max_diff = float(jnp.max(jnp.abs(y - y_ref)))
    # bf16 activations/MXU inputs (f32 accumulation) -> tolerance looser than pure-f32.
    assert jnp.allclose(y, y_ref, rtol=3e-2, atol=3e-2), max_diff
    assert mem_delta == 0
    print("KERNEL_OK")
</pallas_src>

<mosaic_0001>
module attributes {stable_mosaic.version = 11 : i64} {
  func.func @_gqa_kernel(%arg0: i32, %arg1: i32, %arg2: memref<1x8x64xbf16, #tpu.memory_space<vmem>>, %arg3: memref<1x64x16xbf16, #tpu.memory_space<vmem>>, %arg4: memref<1x1x16xf32, #tpu.memory_space<vmem>>, %arg5: memref<1x64x16xbf16, #tpu.memory_space<vmem>>, %arg6: memref<1x1x16xf32, #tpu.memory_space<vmem>>, %arg7: memref<1x64x16xbf16, #tpu.memory_space<vmem>>, %arg8: memref<1x1x16xf32, #tpu.memory_space<vmem>>, %arg9: memref<1x16x64xbf16, #tpu.memory_space<vmem>>, %arg10: memref<1x1x64xf32, #tpu.memory_space<vmem>>, %arg11: memref<8x8xf32, #tpu.memory_space<vmem>>, %arg12: memref<8x8xf32, #tpu.memory_space<vmem>>, %arg13: memref<1x8x64xf32, #tpu.memory_space<vmem>>) attributes {dimension_semantics = [#tpu.dimension_semantics<parallel>, #tpu.dimension_semantics<arbitrary>], iteration_bounds = array<i64: 2, 2>, scalar_prefetch = 0 : i64, scratch_operands = 0 : i64, tpu.core_type = #tpu.core_type<tc>, window_params = [{transform_indices = @transform_0, window_bounds = array<i64: 1, 8, 64>}, {transform_indices = @transform_1, window_bounds = array<i64: 1, 64, 16>}, {transform_indices = @transform_2, window_bounds = array<i64: 1, 1, 16>}, {transform_indices = @transform_3, window_bounds = array<i64: 1, 64, 16>}, {transform_indices = @transform_4, window_bounds = array<i64: 1, 1, 16>}, {transform_indices = @transform_5, window_bounds = array<i64: 1, 64, 16>}, {transform_indices = @transform_6, window_bounds = array<i64: 1, 1, 16>}, {transform_indices = @transform_7, window_bounds = array<i64: 1, 16, 64>}, {pipeline_mode = #tpu.pipeline_mode<synchronous>, transform_indices = @transform_8, window_bounds = array<i64: 1, 1, 64>}, {pipeline_mode = #tpu.pipeline_mode<synchronous>, transform_indices = @transform_9, window_bounds = array<i64: 8, 8>}, {pipeline_mode = #tpu.pipeline_mode<synchronous>, transform_indices = @transform_10, window_bounds = array<i64: 8, 8>}, {transform_indices = @transform_11, window_bounds = array<i64: 1, 8, 64>}]} {
    %c0 = arith.constant 0 : index
    %c0_0 = arith.constant 0 : index
    %c0_1 = arith.constant 0 : index
    %0 = vector.load %arg2[%c0, %c0_0, %c0_1] : memref<1x8x64xbf16, #tpu.memory_space<vmem>>, vector<1x8x64xbf16>
    %1 = vector.shape_cast %0 : vector<1x8x64xbf16> to vector<8x64xbf16>
    %c0_2 = arith.constant 0 : index
    %c0_3 = arith.constant 0 : index
    %c0_4 = arith.constant 0 : index
    %2 = vector.load %arg3[%c0_2, %c0_3, %c0_4] : memref<1x64x16xbf16, #tpu.memory_space<vmem>>, vector<1x64x16xbf16>
    %3 = vector.shape_cast %2 : vector<1x64x16xbf16> to vector<64x16xbf16>
    %cst = arith.constant dense<0.000000e+00> : vector<8x16xf32>
    %4 = tpu.matmul %1, %3, %cst {dimension_numbers = #tpu.dot_dimension_numbers<[1], [0], [0], [1], [0, 0, 1, 1], [], []>} : vector<8x64xbf16>, vector<64x16xbf16>, vector<8x16xf32> -> vector<8x16xf32>
    %c0_5 = arith.constant 0 : index
    %c0_6 = arith.constant 0 : index
    %c0_7 = arith.constant 0 : index
    %5 = vector.load %arg4[%c0_5, %c0_6, %c0_7] : memref<1x1x16xf32, #tpu.memory_space<vmem>>, vector<1x1x16xf32>
    %6 = vector.shape_cast %5 : vector<1x1x16xf32> to vector<1x16xf32>
    %7 = vector.broadcast %6 : vector<1x16xf32> to vector<8x16xf32>
    %8 = arith.addf %4, %7 : vector<8x16xf32>
    %c0_8 = arith.constant 0 : index
    %c0_9 = arith.constant 0 : index
    %c0_10 = arith.constant 0 : index
    %9 = vector.load %arg5[%c0_8, %c0_9, %c0_10] : memref<1x64x16xbf16, #tpu.memory_space<vmem>>, vector<1x64x16xbf16>
    %10 = vector.shape_cast %9 : vector<1x64x16xbf16> to vector<64x16xbf16>
    %cst_11 = arith.constant dense<0.000000e+00> : vector<8x16xf32>
    %11 = tpu.matmul %1, %10, %cst_11 {dimension_numbers = #tpu.dot_dimension_numbers<[1], [0], [0], [1], [0, 0, 1, 1], [], []>} : vector<8x64xbf16>, vector<64x16xbf16>, vector<8x16xf32> -> vector<8x16xf32>
    %c0_12 = arith.constant 0 : index
    %c0_13 = arith.constant 0 : index
    %c0_14 = arith.constant 0 : index
    %12 = vector.load %arg6[%c0_12, %c0_13, %c0_14] : memref<1x1x16xf32, #tpu.memory_space<vmem>>, vector<1x1x16xf32>
    %13 = vector.shape_cast %12 : vector<1x1x16xf32> to vector<1x16xf32>
    %14 = vector.broadcast %13 : vector<1x16xf32> to vector<8x16xf32>
    %15 = arith.addf %11, %14 : vector<8x16xf32>
    %c0_15 = arith.constant 0 : index
    %c0_16 = arith.constant 0 : index
    %c0_17 = arith.constant 0 : index
    %16 = vector.load %arg7[%c0_15, %c0_16, %c0_17] : memref<1x64x16xbf16, #tpu.memory_space<vmem>>, vector<1x64x16xbf16>
    %17 = vector.shape_cast %16 : vector<1x64x16xbf16> to vector<64x16xbf16>
    %cst_18 = arith.constant dense<0.000000e+00> : vector<8x16xf32>
    %18 = tpu.matmul %1, %17, %cst_18 {dimension_numbers = #tpu.dot_dimension_numbers<[1], [0], [0], [1], [0, 0, 1, 1], [], []>} : vector<8x64xbf16>, vector<64x16xbf16>, vector<8x16xf32> -> vector<8x16xf32>
    %c0_19 = arith.constant 0 : index
    %c0_20 = arith.constant 0 : index
    %c0_21 = arith.constant 0 : index
    %19 = vector.load %arg8[%c0_19, %c0_20, %c0_21] : memref<1x1x16xf32, #tpu.memory_space<vmem>>, vector<1x1x16xf32>
    %20 = vector.shape_cast %19 : vector<1x1x16xf32> to vector<1x16xf32>
    %21 = vector.broadcast %20 : vector<1x16xf32> to vector<8x16xf32>
    %22 = arith.addf %18, %21 : vector<8x16xf32>
    %23 = arith.truncf %22 : vector<8x16xf32> to vector<8x16xbf16>
    %c0_22 = arith.constant 0 : index
    %c0_23 = arith.constant 0 : index
    %24 = vector.load %arg11[%c0_22, %c0_23] : memref<8x8xf32, #tpu.memory_space<vmem>>, vector<8x8xf32>
    %c0_24 = arith.constant 0 : index
    %c0_25 = arith.constant 0 : index
    %25 = vector.load %arg12[%c0_24, %c0_25] : memref<8x8xf32, #tpu.memory_space<vmem>>, vector<8x8xf32>
    %26 = vector.extract_strided_slice %8 {offsets = [0, 0], sizes = [8, 8], strides = [1, 1]} : vector<8x16xf32> to vector<8x8xf32>
    %27 = vector.extract_strided_slice %8 {offsets = [0, 8], sizes = [8, 8], strides = [1, 1]} : vector<8x16xf32> to vector<8x8xf32>
    %28 = arith.mulf %26, %24 : vector<8x8xf32>
    %29 = arith.mulf %27, %25 : vector<8x8xf32>
    %30 = arith.subf %28, %29 : vector<8x8xf32>
    %31 = arith.mulf %26, %25 : vector<8x8xf32>
    %32 = arith.mulf %27, %24 : vector<8x8xf32>
    %33 = arith.addf %31, %32 : vector<8x8xf32>
    %34 = tpu.concatenate %30, %33 in 1 : vector<8x8xf32>, vector<8x8xf32> -> vector<8x16xf32>
    %35 = arith.truncf %34 : vector<8x16xf32> to vector<8x16xbf16>
    %36 = vector.shape_cast %35 : vector<8x16xbf16> to vector<1x8x16xbf16>
    %37 = vector.extract_strided_slice %15 {offsets = [0, 0], sizes = [8, 8], strides = [1, 1]} : vector<8x16xf32> to vector<8x8xf32>
    %38 = vector.extract_strided_slice %15 {offsets = [0, 8], sizes = [8, 8], strides = [1, 1]} : vector<8x16xf32> to vector<8x8xf32>
    %39 = arith.mulf %37, %24 : vector<8x8xf32>
    %40 = arith.mulf %38, %25 : vector<8x8xf32>
    %41 = arith.subf %39, %40 : vector<8x8xf32>
    %42 = arith.mulf %37, %25 : vector<8x8xf32>
    %43 = arith.mulf %38, %24 : vector<8x8xf32>
    %44 = arith.addf %42, %43 : vector<8x8xf32>
    %45 = tpu.concatenate %41, %44 in 1 : vector<8x8xf32>, vector<8x8xf32> -> vector<8x16xf32>
    %46 = arith.truncf %45 : vector<8x16xf32> to vector<8x16xbf16>
    %47 = vector.shape_cast %46 : vector<8x16xbf16> to vector<1x8x16xbf16>
    %48 = vector.shape_cast %23 : vector<8x16xbf16> to vector<1x8x16xbf16>
    "tpu.trace_start"() <{level = 10 : i32, message = "bqd,bkd->bqk"}> : () -> ()
    %cst_26 = arith.constant dense<0.000000e+00> : vector<1x8x8xf32>
    %49 = tpu.matmul %36, %47, %cst_26 {dimension_numbers = #tpu.dot_dimension_numbers<[2], [2], [1], [1], [0, 0, 0, 1, 1, 1], [0], [0]>} : vector<1x8x16xbf16>, vector<1x8x16xbf16>, vector<1x8x8xf32> -> vector<1x8x8xf32>
    "tpu.trace_stop"() : () -> ()
    %50 = tpu.iota {dimensions = array<i32: 0>} : vector<8x8xi32>
    %51 = tpu.iota {dimensions = array<i32: 1>} : vector<8x8xi32>
    %52 = arith.cmpi sle, %51, %50 : vector<8x8xi32>
    %53 = vector.shape_cast %52 : vector<8x8xi1> to vector<1x8x8xi1>
    %cst_27 = arith.constant -1.000000e+30 : f32
    %54 = vector.broadcast %cst_27 : f32 to vector<1x8x8xf32>
    %55 = arith.select %53, %49, %54 : vector<1x8x8xi1>, vector<1x8x8xf32>
    %cst_28 = arith.constant dense<0xFF800000> : vector<1x8xf32>
    %56 = vector.multi_reduction <maximumf>, %55, %cst_28 [2] : vector<1x8x8xf32> to vector<1x8xf32>
    %57 = vector.shape_cast %56 : vector<1x8xf32> to vector<1x8x1xf32>
    %58 = vector.broadcast %57 : vector<1x8x1xf32> to vector<1x8x8xf32>
    %59 = arith.subf %55, %58 : vector<1x8x8xf32>
    %60 = math.exp %59 : vector<1x8x8xf32>
    %cst_29 = arith.constant dense<0.000000e+00> : vector<1x8xf32>
    %61 = vector.multi_reduction <add>, %60, %cst_29 [2] : vector<1x8x8xf32> to vector<1x8xf32>
    %62 = vector.shape_cast %61 : vector<1x8xf32> to vector<1x8x1xf32>
    %63 = tpu.reciprocal %62 {approx = true} : vector<1x8x1xf32> -> vector<1x8x1xf32>
    %64 = vector.broadcast %63 : vector<1x8x1xf32> to vector<1x8x8xf32>
    %65 = arith.mulf %60, %64 : vector<1x8x8xf32>
    %66 = arith.truncf %65 : vector<1x8x8xf32> to vector<1x8x8xbf16>
    "tpu.trace_start"() <{level = 10 : i32, message = "bqk,bkd->bqd"}> : () -> ()
    %cst_30 = arith.constant dense<0.000000e+00> : vector<1x8x16xf32>
    %67 = tpu.matmul %66, %48, %cst_30 {dimension_numbers = #tpu.dot_dimension_numbers<[2], [1], [1], [2], [0, 0, 0, 1, 1, 2], [0], [0]>} : vector<1x8x8xbf16>, vector<1x8x16xbf16>, vector<1x8x16xf32> -> vector<1x8x16xf32>
    "tpu.trace_stop"() : () -> ()
    %68 = vector.shape_cast %67 : vector<1x8x16xf32> to vector<8x16xf32>
    %69 = arith.truncf %68 : vector<8x16xf32> to vector<8x16xbf16>
    %c0_31 = arith.constant 0 : index
    %c0_32 = arith.constant 0 : index
    %c0_33 = arith.constant 0 : index
    %70 = vector.load %arg9[%c0_31, %c0_32, %c0_33] : memref<1x16x64xbf16, #tpu.memory_space<vmem>>, vector<1x16x64xbf16>
    %71 = vector.shape_cast %70 : vector<1x16x64xbf16> to vector<16x64xbf16>
    %cst_34 = arith.constant dense<0.000000e+00> : vector<8x64xf32>
    %72 = tpu.matmul %69, %71, %cst_34 {dimension_numbers = #tpu.dot_dimension_numbers<[1], [0], [0], [1], [0, 0, 1, 1], [], []>} : vector<8x16xbf16>, vector<16x64xbf16>, vector<8x64xf32> -> vector<8x64xf32>
    %73 = vector.shape_cast %72 : vector<8x64xf32> to vector<1x8x64xf32>
    %c0_i32 = arith.constant 0 : i32
    %74 = arith.cmpi eq, %arg1, %c0_i32 : i32
    %75 = arith.extui %74 : i1 to i32
    %c0_i32_35 = arith.constant 0 : i32
    %76 = arith.cmpi ne, %75, %c0_i32_35 : i32
    scf.if %76 {
      %c0_38 = arith.constant 0 : index
      %c0_39 = arith.constant 0 : index
      %c0_40 = arith.constant 0 : index
      %80 = vector.load %arg10[%c0_38, %c0_39, %c0_40] : memref<1x1x64xf32, #tpu.memory_space<vmem>>, vector<1x1x64xf32>
      %81 = vector.broadcast %80 : vector<1x1x64xf32> to vector<1x8x64xf32>
      %82 = arith.addf %73, %81 : vector<1x8x64xf32>
      %c0_41 = arith.constant 0 : index
      %c0_42 = arith.constant 0 : index
      %c0_43 = arith.constant 0 : index
      %83 = vector.load %arg13[%c0_41, %c0_42, %c0_43] : memref<1x8x64xf32, #tpu.memory_space<vmem>>, vector<1x8x64xf32>
      tpu.vector_store %arg13[%c0_41, %c0_42, %c0_43], %82 {strides = array<i32>} : memref<1x8x64xf32, #tpu.memory_space<vmem>>, vector<1x8x64xf32>,
    } else {
    }
    %c0_i32_36 = arith.constant 0 : i32
    %77 = arith.cmpi ne, %arg1, %c0_i32_36 : i32
    %78 = arith.extui %77 : i1 to i32
    %c0_i32_37 = arith.constant 0 : i32
    %79 = arith.cmpi ne, %78, %c0_i32_37 : i32
    scf.if %79 {
      %c0_38 = arith.constant 0 : index
      %c0_39 = arith.constant 0 : index
      %c0_40 = arith.constant 0 : index
      %80 = vector.load %arg13[%c0_38, %c0_39, %c0_40] : memref<1x8x64xf32, #tpu.memory_space<vmem>>, vector<1x8x64xf32>
      %81 = arith.addf %80, %73 : vector<1x8x64xf32>
      %c0_41 = arith.constant 0 : index
      %c0_42 = arith.constant 0 : index
      %c0_43 = arith.constant 0 : index
      %82 = vector.load %arg13[%c0_41, %c0_42, %c0_43] : memref<1x8x64xf32, #tpu.memory_space<vmem>>, vector<1x8x64xf32>
      tpu.vector_store %arg13[%c0_41, %c0_42, %c0_43], %81 {strides = array<i32>} : memref<1x8x64xf32, #tpu.memory_space<vmem>>, vector<1x8x64xf32>,
    } else {
    }
    return
  }
  func.func @transform_0(%arg0: i32, %arg1: i32) -> (i32, i32, i32) {
    %c0_i32 = arith.constant 0 : i32
    %c0_i32_0 = arith.constant 0 : i32
    %c0_i32_1 = arith.constant 0 : i32
    return %arg0, %c0_i32, %c0_i32_0 : i32, i32, i32
  }
  func.func @transform_1(%arg0: i32, %arg1: i32) -> (i32, i32, i32) {
    %c0_i32 = arith.constant 0 : i32
    %c0_i32_0 = arith.constant 0 : i32
    %c0_i32_1 = arith.constant 0 : i32
    return %arg1, %c0_i32, %c0_i32_0 : i32, i32, i32
  }
  func.func @transform_2(%arg0: i32, %arg1: i32) -> (i32, i32, i32) {
    %c0_i32 = arith.constant 0 : i32
    %c0_i32_0 = arith.constant 0 : i32
    %c0_i32_1 = arith.constant 0 : i32
    return %arg1, %c0_i32, %c0_i32_0 : i32, i32, i32
  }
  func.func @transform_3(%arg0: i32, %arg1: i32) -> (i32, i32, i32) {
    %c0_i32 = arith.constant 0 : i32
    %c0_i32_0 = arith.constant 0 : i32
    %c0_i32_1 = arith.constant 0 : i32
    return %arg1, %c0_i32, %c0_i32_0 : i32, i32, i32
  }
  func.func @transform_4(%arg0: i32, %arg1: i32) -> (i32, i32, i32) {
    %c0_i32 = arith.constant 0 : i32
    %c0_i32_0 = arith.constant 0 : i32
    %c0_i32_1 = arith.constant 0 : i32
    return %arg1, %c0_i32, %c0_i32_0 : i32, i32, i32
  }
  func.func @transform_5(%arg0: i32, %arg1: i32) -> (i32, i32, i32) {
    %c0_i32 = arith.constant 0 : i32
    %c0_i32_0 = arith.constant 0 : i32
    %c0_i32_1 = arith.constant 0 : i32
    return %arg1, %c0_i32, %c0_i32_0 : i32, i32, i32
  }
  func.func @transform_6(%arg0: i32, %arg1: i32) -> (i32, i32, i32) {
    %c0_i32 = arith.constant 0 : i32
    %c0_i32_0 = arith.constant 0 : i32
    %c0_i32_1 = arith.constant 0 : i32
    return %arg1, %c0_i32, %c0_i32_0 : i32, i32, i32
  }
  func.func @transform_7(%arg0: i32, %arg1: i32) -> (i32, i32, i32) {
    %c0_i32 = arith.constant 0 : i32
    %c0_i32_0 = arith.constant 0 : i32
    %c0_i32_1 = arith.constant 0 : i32
    return %arg1, %c0_i32, %c0_i32_0 : i32, i32, i32
  }
  func.func @transform_8(%arg0: i32, %arg1: i32) -> (i32, i32, i32) {
    %c0_i32 = arith.constant 0 : i32
    %c0_i32_0 = arith.constant 0 : i32
    %c0_i32_1 = arith.constant 0 : i32
    %c0_i32_2 = arith.constant 0 : i32
    return %c0_i32, %c0_i32_0, %c0_i32_1 : i32, i32, i32
  }
  func.func @transform_9(%arg0: i32, %arg1: i32) -> (i32, i32) {
    %c0_i32 = arith.constant 0 : i32
    %c0_i32_0 = arith.constant 0 : i32
    %c0_i32_1 = arith.constant 0 : i32
    return %c0_i32, %c0_i32_0 : i32, i32
  }
  func.func @transform_10(%arg0: i32, %arg1: i32) -> (i32, i32) {
    %c0_i32 = arith.constant 0 : i32
    %c0_i32_0 = arith.constant 0 : i32
    %c0_i32_1 = arith.constant 0 : i32
    return %c0_i32, %c0_i32_0 : i32, i32
  }
  func.func @transform_11(%arg0: i32, %arg1: i32) -> (i32, i32, i32) {
    %c0_i32 = arith.constant 0 : i32
    %c0_i32_0 = arith.constant 0 : i32
    %c0_i32_1 = arith.constant 0 : i32
    return %arg0, %c0_i32, %c0_i32_0 : i32, i32, i32
  }
}

</mosaic_0001>

<llo_original>
// kernel: tpu_custom_call.1
$region0: #{tpu_custom_call.1}
  #allocation0 [shape = 'u32[]', space=smem, size = 0x4, offset = 0x4, fixed_abs, tag = 'smem constant byte address 0x4 - core index']
  #allocation1 [shape = 'u32[144,128]{1,0:T(1,128)}', space=vmem, size = 0x12000, scoped, tag = 'internal scratch']
  %s0 = inlined_call_operand.vmem [shape: bf16[2,8,64], index: 0, kind: input, shape index: {}]
  %s1 = inlined_call_operand.vmem [shape: bf16[2,64,16], index: 1, kind: input, shape index: {}]
  %s2 = inlined_call_operand.vmem [shape: f32[2,1,16], index: 2, kind: input, shape index: {}]
  %s3 = inlined_call_operand.vmem [shape: bf16[2,64,16], index: 3, kind: input, shape index: {}]
  %s4 = inlined_call_operand.vmem [shape: f32[2,1,16], index: 4, kind: input, shape index: {}]
  %s5 = inlined_call_operand.vmem [shape: bf16[2,64,16], index: 5, kind: input, shape index: {}]
  %s6 = inlined_call_operand.vmem [shape: f32[2,1,16], index: 6, kind: input, shape index: {}]
  %s7 = inlined_call_operand.vmem [shape: bf16[2,16,64], index: 7, kind: input, shape index: {}]
  %s8 = inlined_call_operand.vmem [shape: f32[1,1,64], index: 8, kind: input, shape index: {}]
  %s9 = inlined_call_operand.vmem [shape: f32[8,8], index: 9, kind: input, shape index: {}]
  %s10 = inlined_call_operand.vmem [shape: f32[8,8], index: 10, kind: input, shape index: {}]
  %s11 = inlined_call_operand.hbm [shape: f32[2,8,64], index: 11, kind: output, shape index: {}]
  %s12 = sld [smem:[#allocation0]]
  $region85: #{tpu_custom_call.1} parent=0
    _
  %s14 = ssub.s32 1, %s12
  %s15 = scalar_select 0, %s14, %s12
  $region1: #{tpu_custom_call.1} parent=0
    #allocation2 [shape = 'u8[8192]{0}', space=vmem, size = 0x2000, scoped, tag = 'output window, operand 0']
    #allocation3 [shape = 's32[2]{0}', space=sflag, size = 0x8, scoped, tag = 'scoped memory for tpu_custom_call.1']
    %16 = vsyncpa [#allocation3], 0
    %s17 = scalar_lea.sflag [#allocation3], 1
    %18 = vsyncpa %s17, 0
    loop: start=0, step=1, limit=6
    $region2: #{tpu_custom_call.1} parent=1 // loop_pre_header
      _
    $region3: #{tpu_custom_call.1} parent=1 // loop_header
      %s20 = sphi 0, %s24
      %p21 = scmp.ge.s32.totalorder %s20, 6
      %s27 = sphi 0, %s39
      %s28 = sphi 0, %s35
      %s29 = sphi 0, %s27
      %s30 = sphi 0, %s28
      %s31 = sphi 0, %s29
      %s32 = sphi 0, %s30
      %s42 = sphi 0, %s44
      %s45 = sphi 0, %s42
      %s46 = sphi 0, %s45
      %s62 = sphi 0, %s46
      %s68 = sphi 0, %s70
      %s71 = sphi 0, %s68
      %s72 = sphi 0, %s71
      %s88 = sphi 0, %s72
      %s94 = sphi 0, %s96
      %s97 = sphi 0, %s94
      %s98 = sphi 0, %s97
      %s114 = sphi 0, %s98
      %s120 = sphi 0, %s122
      %s123 = sphi 0, %s120
      %s124 = sphi 0, %s123
      %s140 = sphi 0, %s124
      %s146 = sphi 0, %s148
      %s149 = sphi 0, %s146
      %s150 = sphi 0, %s149
      %s166 = sphi 0, %s150
      %s172 = sphi 0, %s174
      %s175 = sphi 0, %s172
      %s176 = sphi 0, %s175
      %s192 = sphi 0, %s176
      %s198 = sphi 0, %s200
      %s201 = sphi 0, %s198
      %s202 = sphi 0, %s201
      %s218 = sphi 0, %s202
      %s224 = sphi 0, %s226
      %s227 = sphi 0, %s224
      %s228 = sphi 0, %s227
      %s244 = sphi 0, %s228
      %s248 = sphi 0, %s248
      %s250 = sphi 0, %s248
      %s251 = sphi 0, %s250
      %s265 = sphi 0, %s251
      %s269 = sphi 0, %s269
      %s271 = sphi 0, %s269
      %s272 = sphi 0, %s271
      %s286 = sphi 0, %s272
      %s290 = sphi 0, %s290
      %s292 = sphi 0, %s290
      %s293 = sphi 0, %s292
      %s307 = sphi 0, %s293
      %s313 = sphi 0, %s315
      %s316 = sphi 0, %s313
      %s317 = sphi 0, %s316
      %s333 = sphi 0, %s317
    $region4: #{tpu_custom_call.1} parent=1 // loop_header_branch
      %23 = sbr.rel (%p21) target = $region8
    $region5: #{tpu_custom_call.1} parent=1 // loop_body
      %s25 = ssub.s32 %s20, 1
      %s26 = ssub.s32 %s20, 2
      %s33 = sadd.s32 1, %s28
      %p34 = scmp.ge.s32.totalorder %s33, 2
      %s35 = scalar_select %p34, 0, %s33
      %s36 = sadd.s32 1, %s27
      %s37 = scalar_select %p34, %s36, %s27
      %p38 = scmp.ge.s32.totalorder %s37, 2
      %s39 = scalar_select %p38, 0, %s37
      %s40 = ssub.s32 %s27, %s39
      %p41 = scmp.eq.s32.totalorder %s40, 0
      %s43 = sadd.s32 %s42, 1
      %s44 = scalar_select %p41, %s42, %s43
      %p47 = pneg %p41
      %p48 = scmp.eq.s32.totalorder %s20, 3
      %p49 = por %p47, %p48
      %p50 = scmp.ne.s32.totalorder %s42, %s45
      %p51 = scmp.eq.s32.totalorder %s20, 0
      %p52 = por %p50, %p51
      %p53 = scmp.ne.s32.totalorder %s42, %s45
      %p54 = scmp.eq.s32.totalorder %s25, 3
      %p55 = por %p53, %p54
      %p56 = scmp.ne.s32.totalorder %s45, %s46
      %p57 = scmp.eq.s32.totalorder %s25, 0
      %p58 = por %p56, %p57
      %p59 = scmp.ne.s32.totalorder %s45, %s46
      %p60 = scmp.eq.s32.totalorder %s26, 3
      %p61 = por %p59, %p60
      %p63 = scmp.ne.s32.totalorder %s46, %s62
      %p64 = scmp.eq.s32.totalorder %s26, 0
      %p65 = por %p63, %p64
      %s66 = ssub.s32 %s28, %s35
      %p67 = scmp.eq.s32.totalorder %s66, 0
      %s69 = sadd.s32 %s68, 1
      %s70 = scalar_select %p67, %s68, %s69
      %p73 = pneg %p67
      %p74 = scmp.eq.s32.totalorder %s20, 3
      %p75 = por %p73, %p74
      %p76 = scmp.ne.s32.totalorder %s68, %s71
      %p77 = scmp.eq.s32.totalorder %s20, 0
      %p78 = por %p76, %p77
      %p79 = scmp.ne.s32.totalorder %s68, %s71
      %p80 = scmp.eq.s32.totalorder %s25, 3
      %p81 = por %p79, %p80
      %p82 = scmp.ne.s32.totalorder %s71, %s72
      %p83 = scmp.eq.s32.totalorder %s25, 0
      %p84 = por %p82, %p83
      %p85 = scmp.ne.s32.totalorder %s71, %s72
      %p86 = scmp.eq.s32.totalorder %s26, 3
      %p87 = por %p85, %p86
      %p89 = scmp.ne.s32.totalorder %s72, %s88
      %p90 = scmp.eq.s32.totalorder %s26, 0
      %p91 = por %p89, %p90
      %s92 = ssub.s32 %s28, %s35
      %p93 = scmp.eq.s32.totalorder %s92, 0
      %s95 = sadd.s32 %s94, 1
      %s96 = scalar_select %p93, %s94, %s95
      %p99 = pneg %p93
      %p100 = scmp.eq.s32.totalorder %s20, 3
      %p101 = por %p99, %p100
      %p102 = scmp.ne.s32.totalorder %s94, %s97
      %p103 = scmp.eq.s32.totalorder %s20, 0
      %p104 = por %p102, %p103
      %p105 = scmp.ne.s32.totalorder %s94, %s97
      %p106 = scmp.eq.s32.totalorder %s25, 3
      %p107 = por %p105, %p106
      %p108 = scmp.ne.s32.totalorder %s97, %s98
      %p109 = scmp.eq.s32.totalorder %s25, 0
      %p110 = por %p108, %p109
      %p111 = scmp.ne.s32.totalorder %s97, %s98
      %p112 = scmp.eq.s32.totalorder %s26, 3
      %p113 = por %p111, %p112
      %p115 = scmp.ne.s32.totalorder %s98, %s114
      %p116 = scmp.eq.s32.totalorder %s26, 0
      %p117 = por %p115, %p116
      %s118 = ssub.s32 %s28, %s35
      %p119 = scmp.eq.s32.totalorder %s118, 0
      %s121 = sadd.s32 %s120, 1
      %s122 = scalar_select %p119, %s120, %s121
      %p125 = pneg %p119
      %p126 = scmp.eq.s32.totalorder %s20, 3
      %p127 = por %p125, %p126
      %p128 = scmp.ne.s32.totalorder %s120, %s123
      %p129 = scmp.eq.s32.totalorder %s20, 0
      %p130 = por %p128, %p129
      %p131 = scmp.ne.s32.totalorder %s120, %s123
      %p132 = scmp.eq.s32.totalorder %s25, 3
      %p133 = por %p131, %p132
      %p134 = scmp.ne.s32.totalorder %s123, %s124
      %p135 = scmp.eq.s32.totalorder %s25, 0
      %p136 = por %p134, %p135
      %p137 = scmp.ne.s32.totalorder %s123, %s124
      %p138 = scmp.eq.s32.totalorder %s26, 3
      %p139 = por %p137, %p138
      %p141 = scmp.ne.s32.totalorder %s124, %s140
      %p142 = scmp.eq.s32.totalorder %s26, 0
      %p143 = por %p141, %p142
      %s144 = ssub.s32 %s28, %s35
      %p145 = scmp.eq.s32.totalorder %s144, 0
      %s147 = sadd.s32 %s146, 1
      %s148 = scalar_select %p145, %s146, %s147
      %p151 = pneg %p145
      %p152 = scmp.eq.s32.totalorder %s20, 3
      %p153 = por %p151, %p152
      %p154 = scmp.ne.s32.totalorder %s146, %s149
      %p155 = scmp.eq.s32.totalorder %s20, 0
      %p156 = por %p154, %p155
      %p157 = scmp.ne.s32.totalorder %s146, %s149
      %p158 = scmp.eq.s32.totalorder %s25, 3
      %p159 = por %p157, %p158
      %p160 = scmp.ne.s32.totalorder %s149, %s150
      %p161 = scmp.eq.s32.totalorder %s25, 0
      %p162 = por %p160, %p161
      %p163 = scmp.ne.s32.totalorder %s149, %s150
      %p164 = scmp.eq.s32.totalorder %s26, 3
      %p165 = por %p163, %p164
      %p167 = scmp.ne.s32.totalorder %s150, %s166
      %p168 = scmp.eq.s32.totalorder %s26, 0
      %p169 = por %p167, %p168
      %s170 = ssub.s32 %s28, %s35
      %p171 = scmp.eq.s32.totalorder %s170, 0
      %s173 = sadd.s32 %s172, 1
      %s174 = scalar_select %p171, %s172, %s173
      %p177 = pneg %p171
      %p178 = scmp.eq.s32.totalorder %s20, 3
      %p179 = por %p177, %p178
      %p180 = scmp.ne.s32.totalorder %s172, %s175
      %p181 = scmp.eq.s32.totalorder %s20, 0
      %p182 = por %p180, %p181
      %p183 = scmp.ne.s32.totalorder %s172, %s175
      %p184 = scmp.eq.s32.totalorder %s25, 3
      %p185 = por %p183, %p184
      %p186 = scmp.ne.s32.totalorder %s175, %s176
      %p187 = scmp.eq.s32.totalorder %s25, 0
      %p188 = por %p186, %p187
      %p189 = scmp.ne.s32.totalorder %s175, %s176
      %p190 = scmp.eq.s32.totalorder %s26, 3
      %p191 = por %p189, %p190
      %p193 = scmp.ne.s32.totalorder %s176, %s192
      %p194 = scmp.eq.s32.totalorder %s26, 0
      %p195 = por %p193, %p194
      %s196 = ssub.s32 %s28, %s35
      %p197 = scmp.eq.s32.totalorder %s196, 0
      %s199 = sadd.s32 %s198, 1
      %s200 = scalar_select %p197, %s198, %s199
      %p203 = pneg %p197
      %p204 = scmp.eq.s32.totalorder %s20, 3
      %p205 = por %p203, %p204
      %p206 = scmp.ne.s32.totalorder %s198, %s201
      %p207 = scmp.eq.s32.totalorder %s20, 0
      %p208 = por %p206, %p207
      %p209 = scmp.ne.s32.totalorder %s198, %s201
      %p210 = scmp.eq.s32.totalorder %s25, 3
      %p211 = por %p209, %p210
      %p212 = scmp.ne.s32.totalorder %s201, %s202
      %p213 = scmp.eq.s32.totalorder %s25, 0
      %p214 = por %p212, %p213
      %p215 = scmp.ne.s32.totalorder %s201, %s202
      %p216 = scmp.eq.s32.totalorder %s26, 3
      %p217 = por %p215, %p216
      %p219 = scmp.ne.s32.totalorder %s202, %s218
      %p220 = scmp.eq.s32.totalorder %s26, 0
      %p221 = por %p219, %p220
      %s222 = ssub.s32 %s28, %s35
      %p223 = scmp.eq.s32.totalorder %s222, 0
      %s225 = sadd.s32 %s224, 1
      %s226 = scalar_select %p223, %s224, %s225
      %p229 = pneg %p223
      %p230 = scmp.eq.s32.totalorder %s20, 3
      %p231 = por %p229, %p230
      %p232 = scmp.ne.s32.totalorder %s224, %s227
      %p233 = scmp.eq.s32.totalorder %s20, 0
      %p234 = por %p232, %p233
      %p235 = scmp.ne.s32.totalorder %s224, %s227
      %p236 = scmp.eq.s32.totalorder %s25, 3
      %p237 = por %p235, %p236
      %p238 = scmp.ne.s32.totalorder %s227, %s228
      %p239 = scmp.eq.s32.totalorder %s25, 0
      %p240 = por %p238, %p239
      %p241 = scmp.ne.s32.totalorder %s227, %s228
      %p242 = scmp.eq.s32.totalorder %s26, 3
      %p243 = por %p241, %p242
      %p245 = scmp.ne.s32.totalorder %s228, %s244
      %p246 = scmp.eq.s32.totalorder %s26, 0
      %p247 = por %p245, %p246
      %s249 = sadd.s32 %s248, 1
      %p252 = scmp.eq.s32.totalorder %s20, 3
      %p253 = scmp.ne.s32.totalorder %s248, %s250
      %p254 = scmp.eq.s32.totalorder %s20, 0
      %p255 = por %p253, %p254
      %p256 = scmp.ne.s32.totalorder %s248, %s250
      %p257 = scmp.eq.s32.totalorder %s25, 3
      %p258 = por %p256, %p257
      %p259 = scmp.ne.s32.totalorder %s250, %s251
      %p260 = scmp.eq.s32.totalorder %s25, 0
      %p261 = por %p259, %p260
      %p262 = scmp.ne.s32.totalorder %s250, %s251
      %p263 = scmp.eq.s32.totalorder %s26, 3
      %p264 = por %p262, %p263
      %p266 = scmp.ne.s32.totalorder %s251, %s265
      %p267 = scmp.eq.s32.totalorder %s26, 0
      %p268 = por %p266, %p267
      %s270 = sadd.s32 %s269, 1
      %p273 = scmp.eq.s32.totalorder %s20, 3
      %p274 = scmp.ne.s32.totalorder %s269, %s271
      %p275 = scmp.eq.s32.totalorder %s20, 0
      %p276 = por %p274, %p275
      %p277 = scmp.ne.s32.totalorder %s269, %s271
      %p278 = scmp.eq.s32.totalorder %s25, 3
      %p279 = por %p277, %p278
      %p280 = scmp.ne.s32.totalorder %s271, %s272
      %p281 = scmp.eq.s32.totalorder %s25, 0
      %p282 = por %p280, %p281
      %p283 = scmp.ne.s32.totalorder %s271, %s272
      %p284 = scmp.eq.s32.totalorder %s26, 3
      %p285 = por %p283, %p284
      %p287 = scmp.ne.s32.totalorder %s272, %s286
      %p288 = scmp.eq.s32.totalorder %s26, 0
      %p289 = por %p287, %p288
      %s291 = sadd.s32 %s290, 1
      %p294 = scmp.eq.s32.totalorder %s20, 3
      %p295 = scmp.ne.s32.totalorder %s290, %s292
      %p296 = scmp.eq.s32.totalorder %s20, 0
      %p297 = por %p295, %p296
      %p298 = scmp.ne.s32.totalorder %s290, %s292
      %p299 = scmp.eq.s32.totalorder %s25, 3
      %p300 = por %p298, %p299
      %p301 = scmp.ne.s32.totalorder %s292, %s293
      %p302 = scmp.eq.s32.totalorder %s25, 0
      %p303 = por %p301, %p302
      %p304 = scmp.ne.s32.totalorder %s292, %s293
      %p305 = scmp.eq.s32.totalorder %s26, 3
      %p306 = por %p304, %p305
      %p308 = scmp.ne.s32.totalorder %s293, %s307
      %p309 = scmp.eq.s32.totalorder %s26, 0
      %p310 = por %p308, %p309
      %s311 = ssub.s32 %s27, %s39
      %p312 = scmp.eq.s32.totalorder %s311, 0
      %s314 = sadd.s32 %s313, 1
      %s315 = scalar_select %p312, %s313, %s314
      %p318 = pneg %p312
      %p319 = scmp.eq.s32.totalorder %s20, 3
      %p320 = por %p318, %p319
      %p321 = scmp.ne.s32.totalorder %s313, %s316
      %p322 = scmp.eq.s32.totalorder %s20, 0
      %p323 = por %p321, %p322
      %p324 = scmp.ne.s32.totalorder %s313, %s316
      %p325 = scmp.eq.s32.totalorder %s25, 3
      %p326 = por %p324, %p325
      %p327 = scmp.ne.s32.totalorder %s316, %s317
      %p328 = scmp.eq.s32.totalorder %s25, 0
      %p329 = por %p327, %p328
      %p330 = scmp.ne.s32.totalorder %s316, %s317
      %p331 = scmp.eq.s32.totalorder %s26, 3
      %p332 = por %p330, %p331
      %p334 = scmp.ne.s32.totalorder %s317, %s333
      %p335 = scmp.eq.s32.totalorder %s26, 0
      %p336 = por %p334, %p335
      %p337 = scmp.le.s32.totalorder 1, %s20
      %p338 = scmp.lt.s32.totalorder %s20, 5
      %p339 = pnand %p337, %p338
      %p340 = pneg %p339
      // Predicated region
      $region9: #{tpu_custom_call.1} parent=5 // pred_check
        _
      $region10: #{tpu_custom_call.1} parent=5 // pred_check_branch
        %342 = sbr.rel (%p339) target = $region12
      $region11: #{tpu_custom_call.1} parent=5 // pred_region
        %s343 = ssub.s32 %s20, 1
        // Predicated region
        $region13: #{tpu_custom_call.1} parent=11 // pred_check
          %p344 = pneg %p261
        $region14: #{tpu_custom_call.1} parent=11 // pred_check_branch
          %346 = sbr.rel (%p344) target = $region16
        $region15: #{tpu_custom_call.1} parent=11 // pred_region
          _
        $region16: #{tpu_custom_call.1} parent=11 // pred_fallthru
          _
        // Predicated region
        $region17: #{tpu_custom_call.1} parent=11 // pred_check
          %p347 = pneg %p282
        $region18: #{tpu_custom_call.1} parent=11 // pred_check_branch
          %349 = sbr.rel (%p347) target = $region20
        $region19: #{tpu_custom_call.1} parent=11 // pred_region
          _
        $region20: #{tpu_custom_call.1} parent=11 // pred_fallthru
          _
        // Predicated region
        $region21: #{tpu_custom_call.1} parent=11 // pred_check
          %p350 = pneg %p303
        $region22: #{tpu_custom_call.1} parent=11 // pred_check_branch
          %352 = sbr.rel (%p350) target = $region24
        $region23: #{tpu_custom_call.1} parent=11 // pred_region
          _
        $region24: #{tpu_custom_call.1} parent=11 // pred_fallthru
          _
      $region12: #{tpu_custom_call.1} parent=5 // pred_fallthru
        _
      %p353 = scmp.lt.s32.totalorder %s20, 4
      // Predicated region
      $region25: #{tpu_custom_call.1} parent=5 // pred_check
        %p354 = pneg %p353
      $region26: #{tpu_custom_call.1} parent=5 // pred_check_branch
        %356 = sbr.rel (%p354) target = $region28
      $region27: #{tpu_custom_call.1} parent=5 // pred_region
        // Predicated region
        $region29: #{tpu_custom_call.1} parent=27 // pred_check
          %p357 = pneg %p52
        $region30: #{tpu_custom_call.1} parent=27 // pred_check_branch
          %359 = sbr.rel (%p357) target = $region32
        $region31: #{tpu_custom_call.1} parent=27 // pred_region
          %p360 = scmp.lt.s32.totalorder %s27, 1
          %s361 = scalar_select %p360, %s27, 1
          %s362 = smul.addr %s361, 4
          %s363 = scalar_lea.vmem %s0, %s362
        $region32: #{tpu_custom_call.1} parent=27 // pred_fallthru
          _
        // Predicated region
        $region33: #{tpu_custom_call.1} parent=27 // pred_check
          %p364 = pneg %p78
        $region34: #{tpu_custom_call.1} parent=27 // pred_check_branch
          %366 = sbr.rel (%p364) target = $region36
        $region35: #{tpu_custom_call.1} parent=27 // pred_region
          %p367 = scmp.lt.s32.totalorder %s28, 1
          %s368 = scalar_select %p367, %s28, 1
          %s369 = smul.addr %s368, 8
          %s370 = smul.addr %s369, 4
          %s371 = scalar_lea.vmem %s1, %s370
        $region36: #{tpu_custom_call.1} parent=27 // pred_fallthru
          _
        // Predicated region
        $region37: #{tpu_custom_call.1} parent=27 // pred_check
          %p372 = pneg %p104
        $region38: #{tpu_custom_call.1} parent=27 // pred_check_branch
          %374 = sbr.rel (%p372) target = $region40
        $region39: #{tpu_custom_call.1} parent=27 // pred_region
          %p375 = scmp.lt.s32.totalorder %s28, 1
          %s376 = scalar_select %p375, %s28, 1
          %s377 = scalar_lea.vmem %s2, %s376
        $region40: #{tpu_custom_call.1} parent=27 // pred_fallthru
          _
        // Predicated region
        $region41: #{tpu_custom_call.1} parent=27 // pred_check
          %p378 = pneg %p130
        $region42: #{tpu_custom_call.1} parent=27 // pred_check_branch
          %380 = sbr.rel (%p378) target = $region44
        $region43: #{tpu_custom_call.1} parent=27 // pred_region
          %p381 = scmp.lt.s32.totalorder %s28, 1
          %s382 = scalar_select %p381, %s28, 1
          %s383 = smul.addr %s382, 8
          %s384 = smul.addr %s383, 4
          %s385 = scalar_lea.vmem %s3, %s384
        $region44: #{tpu_custom_call.1} parent=27 // pred_fallthru
          _
        // Predicated region
        $region45: #{tpu_custom_call.1} parent=27 // pred_check
          %p386 = pneg %p156
        $region46: #{tpu_custom_call.1} parent=27 // pred_check_branch
          %388 = sbr.rel (%p386) target = $region48
        $region47: #{tpu_custom_call.1} parent=27 // pred_region
          %p389 = scmp.lt.s32.totalorder %s28, 1
          %s390 = scalar_select %p389, %s28, 1
          %s391 = scalar_lea.vmem %s4, %s390
        $region48: #{tpu_custom_call.1} parent=27 // pred_fallthru
          _
        // Predicated region
        $region49: #{tpu_custom_call.1} parent=27 // pred_check
          %p392 = pneg %p182
        $region50: #{tpu_custom_call.1} parent=27 // pred_check_branch
          %394 = sbr.rel (%p392) target = $region52
        $region51: #{tpu_custom_call.1} parent=27 // pred_region
          %p395 = scmp.lt.s32.totalorder %s28, 1
          %s396 = scalar_select %p395, %s28, 1
          %s397 = smul.addr %s396, 8
          %s398 = smul.addr %s397, 4
          %s399 = scalar_lea.vmem %s5, %s398
        $region52: #{tpu_custom_call.1} parent=27 // pred_fallthru
          _
        // Predicated region
        $region53: #{tpu_custom_call.1} parent=27 // pred_check
          %p400 = pneg %p208
        $region54: #{tpu_custom_call.1} parent=27 // pred_check_branch
          %402 = sbr.rel (%p400) target = $region56
        $region55: #{tpu_custom_call.1} parent=27 // pred_region
          %p403 = scmp.lt.s32.totalorder %s28, 1
          %s404 = scalar_select %p403, %s28, 1
          %s405 = scalar_lea.vmem %s6, %s404
        $region56: #{tpu_custom_call.1} parent=27 // pred_fallthru
          _
        // Predicated region
        $region57: #{tpu_custom_call.1} parent=27 // pred_check
          %p406 = pneg %p234
        $region58: #{tpu_custom_call.1} parent=27 // pred_check_branch
          %408 = sbr.rel (%p406) target = $region60
        $region59: #{tpu_custom_call.1} parent=27 // pred_region
          %p409 = scmp.lt.s32.totalorder %s28, 1
          %s410 = scalar_select %p409, %s28, 1
          %s411 = smul.addr %s410, 2
          %s412 = smul.addr %s411, 4
          %s413 = scalar_lea.vmem %s7, %s412
        $region60: #{tpu_custom_call.1} parent=27 // pred_fallthru
          _
      $region28: #{tpu_custom_call.1} parent=5 // pred_fallthru
        _
      %p414 = scmp.le.s32.totalorder 1, %s20
      %p415 = scmp.lt.s32.totalorder %s20, 5
      %p416 = pnand %p414, %p415
      %p417 = pneg %p416
      // Predicated region
      $region61: #{tpu_custom_call.1} parent=5 // pred_check
        _
      $region62: #{tpu_custom_call.1} parent=5 // pred_check_branch
        %419 = sbr.rel (%p416) target = $region64
      $region63: #{tpu_custom_call.1} parent=5 // pred_region
        %s420 = ssub.s32 %s20, 1
        %p421 = scmp.lt.s32.totalorder %s29, 1
        %s422 = scalar_select %p421, %s29, 1
        %s423 = smul.addr %s422, 4
        %s424 = scalar_lea.vmem %s0, %s423
        %p425 = pneg %p58
        %p426 = pneg %p55
        %p427 = scmp.lt.s32.totalorder %s30, 1
        %s428 = scalar_select %p427, %s30, 1
        %s429 = smul.addr %s428, 8
        %s430 = smul.addr %s429, 4
        %s431 = scalar_lea.vmem %s1, %s430
        %p432 = pneg %p84
        %p433 = pneg %p81
        %p434 = scmp.lt.s32.totalorder %s30, 1
        %s435 = scalar_select %p434, %s30, 1
        %s436 = scalar_lea.vmem %s2, %s435
        %p437 = pneg %p110
        %p438 = pneg %p107
        %p439 = scmp.lt.s32.totalorder %s30, 1
        %s440 = scalar_select %p439, %s30, 1
        %s441 = smul.addr %s440, 8
        %s442 = smul.addr %s441, 4
        %s443 = scalar_lea.vmem %s3, %s442
        %p444 = pneg %p136
        %p445 = pneg %p133
        %p446 = scmp.lt.s32.totalorder %s30, 1
        %s447 = scalar_select %p446, %s30, 1
        %s448 = scalar_lea.vmem %s4, %s447
        %p449 = pneg %p162
        %p450 = pneg %p159
        %p451 = scmp.lt.s32.totalorder %s30, 1
        %s452 = scalar_select %p451, %s30, 1
        %s453 = smul.addr %s452, 8
        %s454 = smul.addr %s453, 4
        %s455 = scalar_lea.vmem %s5, %s454
        %p456 = pneg %p188
        %p457 = pneg %p185
        %p458 = scmp.lt.s32.totalorder %s30, 1
        %s459 = scalar_select %p458, %s30, 1
        %s460 = scalar_lea.vmem %s6, %s459
        %p461 = pneg %p214
        %p462 = pneg %p211
        %p463 = scmp.lt.s32.totalorder %s30, 1
        %s464 = scalar_select %p463, %s30, 1
        %s465 = smul.addr %s464, 2
        %s466 = smul.addr %s465, 4
        %s467 = scalar_lea.vmem %s7, %s466
        %p468 = pneg %p240
        %p469 = pneg %p237
        %p470 = pneg %p261
        %p471 = pneg %p258
        %p472 = pneg %p282
        %p473 = pneg %p279
        %p474 = pneg %p303
        %p475 = pneg %p300
        %p476 = pneg %p329
        %p477 = pneg %p326
        %s478 = sand.u32 %s316, 1
        %s479 = scalar_lea.sflag [#allocation3], %s478
        %s480 = sand.u32 %s316, 1
        %s481 = smul.addr %s480, 8
        %s482 = scalar_lea.vmem [#allocation2], %s481
        %p483 = scmp.lt.s32.totalorder %s29, 1
        %s484 = scalar_select %p483, %s29, 1
        %s485 = smul.addr %s484, 4
        %s486 = scalar_lea.vmem %s0, %s485
        %p487 = scmp.lt.s32.totalorder %s30, 1
        %s488 = scalar_select %p487, %s30, 1
        %s489 = smul.addr %s488, 8
        %s490 = smul.addr %s489, 4
        %s491 = scalar_lea.vmem %s1, %s490
        %p492 = scmp.lt.s32.totalorder %s30, 1
        %s493 = scalar_select %p492, %s30, 1
        %s494 = scalar_lea.vmem %s2, %s493
        %p495 = scmp.lt.s32.totalorder %s30, 1
        %s496 = scalar_select %p495, %s30, 1
        %s497 = smul.addr %s496, 8
        %s498 = smul.addr %s497, 4
        %s499 = scalar_lea.vmem %s3, %s498
        %p500 = scmp.lt.s32.totalorder %s30, 1
        %s501 = scalar_select %p500, %s30, 1
        %s502 = scalar_lea.vmem %s4, %s501
        %p503 = scmp.lt.s32.totalorder %s30, 1
        %s504 = scalar_select %p503, %s30, 1
        %s505 = smul.addr %s504, 8
        %s506 = smul.addr %s505, 4
        %s507 = scalar_lea.vmem %s5, %s506
        %p508 = scmp.lt.s32.totalorder %s30, 1
        %s509 = scalar_select %p508, %s30, 1
        %s510 = scalar_lea.vmem %s6, %s509
        %p511 = scmp.lt.s32.totalorder %s30, 1
        %s512 = scalar_select %p511, %s30, 1
        %s513 = smul.addr %s512, 2
        %s514 = smul.addr %s513, 4
        %s515 = scalar_lea.vmem %s7, %s514
        %v517 = vld [vmem:[%s486] sm:$0xf]
        %v518 = vld [vmem:[%s491] sm:$0xf]
        %v519 = vld [vmem:[%s491 + $0x4] sm:$0xf]
        %v520 = vld [vmem:[%s491 + $0x8] sm:$0xf]
        %v521 = vld [vmem:[%s491 + $0xc] sm:$0xf]
        %v522 = vld [vmem:[%s491 + $0x10] sm:$0xf]
        %v523 = vld [vmem:[%s491 + $0x14] sm:$0xf]
        %v524 = vld [vmem:[%s491 + $0x18] sm:$0xf]
        %v525 = vld [vmem:[%s491 + $0x1c] sm:$0xf]
        %v526 = vld [vmem:[%s494] sm:$0x1]
        %v528 = vlaneseq
        %v529 = vshrl.u32 %v528, 7
        %v530 = vsub.s32 0, %v529
        %v531 = vrot.slane %v526, %v530
        %v541 = vunpack.c.l.b16 %v518
        %v542 = vunpack.c.l.b16 %v519
        %v543 = vunpack.c.l.b16 %v520
        %v544 = vunpack.c.l.b16 %v521
        %v545 = vunpack.c.l.b16 %v522
        %v546 = vunpack.c.l.b16 %v523
        %v547 = vunpack.c.l.b16 %v524
        %v548 = vunpack.c.l.b16 %v525
        %v549 = vpack.c.b16 %v542, %v541
        %v550 = vpack.c.b16 %v544, %v543
        %v551 = vpack.c.b16 %v546, %v545
        %v552 = vpack.c.b16 %v548, %v547
        %vm557 = vcmask 523264
        %v559 = vsel %vm557, %v517, 0
        %561 = vmatprep.subr.bf16.mxu0 0
        %562 = vmatpush1.bf16.msra.mxu0 %v549
        %563 = vmatprep.subr.bf16.mxu0 0
        %564 = vmatpush1.bf16.msra.mxu0 %v550
        %565 = vmatprep.subr.bf16.mxu0 0
        %566 = vmatpush1.bf16.msra.mxu0 %v551
        %567 = vmatprep.subr.bf16.mxu0 0
        %568 = vmatpush1.bf16.msra.mxu0 %v552
        %569 = vmatprep.subr.bf16.mxu0 0
        %570 = vmatpush1.bf16.msra.mxu0 0
        %571 = vmatprep.subr.bf16.mxu0 0
        %572 = vmatpush1.bf16.msra.mxu0 0
        %573 = vmatprep.subr.bf16.mxu0 0
        %574 = vmatpush1.bf16.msra.mxu0 0
        %575 = vmatprep.subr.bf16.mxu0 0
        %576 = vmatpush1.bf16.msra.mxu0 0
        %577 = vmatprep.subr.bf16.mxu0 0
        %578 = vmatpush1.bf16.msra.mxu0 0
        %579 = vmatprep.subr.bf16.mxu0 0
        %580 = vmatpush1.bf16.msra.mxu0 0
        %581 = vmatprep.subr.bf16.mxu0 0
        %582 = vmatpush1.bf16.msra.mxu0 0
        %583 = vmatprep.subr.bf16.mxu0 0
        %584 = vmatpush1.bf16.msra.mxu0 0
        %585 = vmatprep.subr.bf16.mxu0 0
        %586 = vmatpush1.bf16.msra.mxu0 0
        %587 = vmatprep.subr.bf16.mxu0 0
        %588 = vmatpush1.bf16.msra.mxu0 0
        %589 = vmatprep.subr.bf16.mxu0 0
        %590 = vmatpush1.bf16.msra.mxu0 0
        %591 = vmatprep.subr.bf16.mxu0 0
        %592 = vmatpush1.bf16.msra.mxu0 0
        %593 = vmatprep.mubr.bf16.mxu0 0
        %594 = vmatmul.mubr.bf16.gmra.mrb[0].mxu0 %v559
        %v595 = vpop.f32.mrb[0].mxu0
        %v596 = vadd.f32 %v531, %v595
        %v597 = vpop.f32.mrb[0].mxu0
        %v598 = vpop.f32.mrb[0].mxu0
        %v599 = vpop.f32.mrb[0].mxu0
        %600 = vdwg.mxu0
        %v601 = vld [vmem:[%s499] sm:$0xf]
        %v602 = vld [vmem:[%s499 + $0x4] sm:$0xf]
        %v603 = vld [vmem:[%s499 + $0x8] sm:$0xf]
        %v604 = vld [vmem:[%s499 + $0xc] sm:$0xf]
        %v605 = vld [vmem:[%s499 + $0x10] sm:$0xf]
        %v606 = vld [vmem:[%s499 + $0x14] sm:$0xf]
        %v607 = vld [vmem:[%s499 + $0x18] sm:$0xf]
        %v608 = vld [vmem:[%s499 + $0x1c] sm:$0xf]
        %v609 = vld [vmem:[%s502] sm:$0x1]
        %v611 = vlaneseq
        %v612 = vshrl.u32 %v611, 7
        %v613 = vsub.s32 0, %v612
        %v614 = vrot.slane %v609, %v613
        %v624 = vunpack.c.l.b16 %v601
        %v625 = vunpack.c.l.b16 %v602
        %v626 = vunpack.c.l.b16 %v603
        %v627 = vunpack.c.l.b16 %v604
        %v628 = vunpack.c.l.b16 %v605
        %v629 = vunpack.c.l.b16 %v606
        %v630 = vunpack.c.l.b16 %v607
        %v631 = vunpack.c.l.b16 %v608
        %v632 = vpack.c.b16 %v625, %v624
        %v633 = vpack.c.b16 %v627, %v626
        %v634 = vpack.c.b16 %v629, %v628
        %v635 = vpack.c.b16 %v631, %v630
        %640 = vmatprep.subr.bf16.mxu0 0
        %641 = vmatpush1.bf16.msra.mxu0 %v632
        %642 = vmatprep.subr.bf16.mxu0 0
        %643 = vmatpush1.bf16.msra.mxu0 %v633
        %644 = vmatprep.subr.bf16.mxu0 0
        %645 = vmatpush1.bf16.msra.mxu0 %v634
        %646 = vmatprep.subr.bf16.mxu0 0
        %647 = vmatpush1.bf16.msra.mxu0 %v635
        %648 = vmatprep.subr.bf16.mxu0 0
        %649 = vmatpush1.bf16.msra.mxu0 0
        %650 = vmatprep.subr.bf16.mxu0 0
        %651 = vmatpush1.bf16.msra.mxu0 0
        %652 = vmatprep.subr.bf16.mxu0 0
        %653 = vmatpush1.bf16.msra.mxu0 0
        %654 = vmatprep.subr.bf16.mxu0 0
        %655 = vmatpush1.bf16.msra.mxu0 0
        %656 = vmatprep.subr.bf16.mxu0 0
        %657 = vmatpush1.bf16.msra.mxu0 0
        %658 = vmatprep.subr.bf16.mxu0 0
        %659 = vmatpush1.bf16.msra.mxu0 0
        %660 = vmatprep.subr.bf16.mxu0 0
        %661 = vmatpush1.bf16.msra.mxu0 0
        %662 = vmatprep.subr.bf16.mxu0 0
        %663 = vmatpush1.bf16.msra.mxu0 0
        %664 = vmatprep.subr.bf16.mxu0 0
        %665 = vmatpush1.bf16.msra.mxu0 0
        %666 = vmatprep.subr.bf16.mxu0 0
        %667 = vmatpush1.bf16.msra.mxu0 0
        %668 = vmatprep.subr.bf16.mxu0 0
        %669 = vmatpush1.bf16.msra.mxu0 0
        %670 = vmatprep.subr.bf16.mxu0 0
        %671 = vmatpush1.bf16.msra.mxu0 0
        %672 = vmatprep.mubr.bf16.mxu0 0
        %673 = vmatmul.mubr.bf16.gmra.mrb[0].mxu0 %v559
        %v674 = vpop.f32.mrb[0].mxu0
        %v675 = vadd.f32 %v614, %v674
        %v676 = vpop.f32.mrb[0].mxu0
        %v677 = vpop.f32.mrb[0].mxu0
        %v678 = vpop.f32.mrb[0].mxu0
        %679 = vdwg.mxu0
        %v680 = vld [vmem:[%s507] sm:$0xf]
        %v681 = vld [vmem:[%s507 + $0x4] sm:$0xf]
        %v682 = vld [vmem:[%s507 + $0x8] sm:$0xf]
        %v683 = vld [vmem:[%s507 + $0xc] sm:$0xf]
        %v684 = vld [vmem:[%s507 + $0x10] sm:$0xf]
        %v685 = vld [vmem:[%s507 + $0x14] sm:$0xf]
        %v686 = vld [vmem:[%s507 + $0x18] sm:$0xf]
        %v687 = vld [vmem:[%s507 + $0x1c] sm:$0xf]
        %v688 = vld [vmem:[%s510] sm:$0x1]
        %v690 = vlaneseq
        %v691 = vshrl.u32 %v690, 7
        %v692 = vsub.s32 0, %v691
        %v693 = vrot.slane %v688, %v692
        %v703 = vunpack.c.l.b16 %v680
        %v704 = vunpack.c.l.b16 %v681
        %v705 = vunpack.c.l.b16 %v682
        %v706 = vunpack.c.l.b16 %v683
        %v707 = vunpack.c.l.b16 %v684
        %v708 = vunpack.c.l.b16 %v685
        %v709 = vunpack.c.l.b16 %v686
        %v710 = vunpack.c.l.b16 %v687
        %v711 = vpack.c.b16 %v704, %v703
        %v712 = vpack.c.b16 %v706, %v705
        %v713 = vpack.c.b16 %v708, %v707
        %v714 = vpack.c.b16 %v710, %v709
        %719 = vmatprep.subr.bf16.mxu0 0
        %720 = vmatpush1.bf16.msra.mxu0 %v711
        %721 = vmatprep.subr.bf16.mxu0 0
        %722 = vmatpush1.bf16.msra.mxu0 %v712
        %723 = vmatprep.subr.bf16.mxu0 0
        %724 = vmatpush1.bf16.msra.mxu0 %v713
        %725 = vmatprep.subr.bf16.mxu0 0
        %726 = vmatpush1.bf16.msra.mxu0 %v714
        %727 = vmatprep.subr.bf16.mxu0 0
        %728 = vmatpush1.bf16.msra.mxu0 0
        %729 = vmatprep.subr.bf16.mxu0 0
        %730 = vmatpush1.bf16.msra.mxu0 0
        %731 = vmatprep.subr.bf16.mxu0 0
        %732 = vmatpush1.bf16.msra.mxu0 0
        %733 = vmatprep.subr.bf16.mxu0 0
        %734 = vmatpush1.bf16.msra.mxu0 0
        %735 = vmatprep.subr.bf16.mxu0 0
        %736 = vmatpush1.bf16.msra.mxu0 0
        %737 = vmatprep.subr.bf16.mxu0 0
        %738 = vmatpush1.bf16.msra.mxu0 0
        %739 = vmatprep.subr.bf16.mxu0 0
        %740 = vmatpush1.bf16.msra.mxu0 0
        %741 = vmatprep.subr.bf16.mxu0 0
        %742 = vmatpush1.bf16.msra.mxu0 0
        %743 = vmatprep.subr.bf16.mxu0 0
        %744 = vmatpush1.bf16.msra.mxu0 0
        %745 = vmatprep.subr.bf16.mxu0 0
        %746 = vmatpush1.bf16.msra.mxu0 0
        %747 = vmatprep.subr.bf16.mxu0 0
        %748 = vmatpush1.bf16.msra.mxu0 0
        %749 = vmatprep.subr.bf16.mxu0 0
        %750 = vmatpush1.bf16.msra.mxu0 0
        %751 = vmatprep.mubr.bf16.mxu0 0
        %752 = vmatmul.mubr.bf16.gmra.mrb[0].mxu0 %v559
        %v753 = vpop.f32.mrb[0].mxu0
        %v754 = vadd.f32 %v693, %v753
        %v755 = vpop.f32.mrb[0].mxu0
        %v756 = vpop.f32.mrb[0].mxu0
        %v757 = vpop.f32.mrb[0].mxu0
        %758 = vdwg.mxu0
        %v759 = vpack.c.bf16 %v754, %v754
        %v760 = vld [vmem:[%s9] sm:$0xff]
        %v761 = vld [vmem:[%s10] sm:$0xff]
        %v762 = vmul.f32 %v596, %v760
        %764 = vrot.lane.b32.xlu0 %v761, 8
        %v765 = vpop.permute.xlu0 %764
        %v767 = vmul.f32 %v596, %v765
        %769 = vrot.lane.b32.xlu0 %v767, 120
        %v770 = vpop.permute.xlu0 %769
        %v772 = vsub.f32 %v762, %v770
        %v773 = vmul.f32 %v596, %v761
        %775 = vrot.lane.b32.xlu0 %v760, 8
        %v776 = vpop.permute.xlu0 %775
        %v778 = vmul.f32 %v596, %v776
        %780 = vrot.lane.b32.xlu0 %v778, 120
        %v781 = vpop.permute.xlu0 %780
        %v783 = vadd.f32 %v773, %v781
        %785 = vrot.lane.b32.xlu0 %v783, 8
        %v786 = vpop.permute.xlu0 %785
        %vm788 = vcmask 64512
        %v789 = vsel %vm788, %v772, %v786
        %v790 = vpack.c.bf16 %v789, %v789
        %v791 = vmul.f32 %v675, %v760
        %v792 = vmul.f32 %v675, %v765
        %794 = vrot.lane.b32.xlu0 %v792, 120
        %v795 = vpop.permute.xlu0 %794
        %v797 = vsub.f32 %v791, %v795
        %v798 = vmul.f32 %v675, %v761
        %v799 = vmul.f32 %v675, %v776
        %801 = vrot.lane.b32.xlu0 %v799, 120
        %v802 = vpop.permute.xlu0 %801
        %v804 = vadd.f32 %v798, %v802
        %806 = vrot.lane.b32.xlu0 %v804, 8
        %v807 = vpop.permute.xlu0 %806
        %v809 = vsel %vm788, %v797, %v807
        %v810 = vpack.c.bf16 %v809, %v809
        %vm811 = vcmask 130048
        %v813 = vsel %vm811, %v790, 0
        %v816 = vsel %vm811, %v810, 0
        %818 = vmatprep.subr.bf16.mxu0 0
        %819 = vmatpush1.bf16.xpose.msra.mxu0 %v816
        %820 = vmatprep.subr.bf16.mxu0 0
        %821 = vmatpush1.bf16.xpose.msra.mxu0 0
        %822 = vmatprep.subr.bf16.mxu0 0
        %823 = vmatpush1.bf16.xpose.msra.mxu0 0
        %824 = vmatprep.subr.bf16.mxu0 0
        %825 = vmatpush1.bf16.xpose.msra.mxu0 0
        %826 = vmatprep.subr.bf16.mxu0 0
        %827 = vmatpush1.bf16.xpose.msra.mxu0 0
        %828 = vmatprep.subr.bf16.mxu0 0
        %829 = vmatpush1.bf16.xpose.msra.mxu0 0
        %830 = vmatprep.subr.bf16.mxu0 0
        %831 = vmatpush1.bf16.xpose.msra.mxu0 0
        %832 = vmatprep.subr.bf16.mxu0 0
        %833 = vmatpush1.bf16.xpose.msra.mxu0 0
        %834 = vmatprep.subr.bf16.mxu0 0
        %835 = vmatpush1.bf16.xpose.msra.mxu0 0
        %836 = vmatprep.subr.bf16.mxu0 0
        %837 = vmatpush1.bf16.xpose.msra.mxu0 0
        %838 = vmatprep.subr.bf16.mxu0 0
        %839 = vmatpush1.bf16.xpose.msra.mxu0 0
        %840 = vmatprep.subr.bf16.mxu0 0
        %841 = vmatpush1.bf16.xpose.msra.mxu0 0
        %842 = vmatprep.subr.bf16.mxu0 0
        %843 = vmatpush1.bf16.xpose.msra.mxu0 0
        %844 = vmatprep.subr.bf16.mxu0 0
        %845 = vmatpush1.bf16.xpose.msra.mxu0 0
        %846 = vmatprep.subr.bf16.mxu0 0
        %847 = vmatpush1.bf16.xpose.msra.mxu0 0
        %848 = vmatprep.subr.bf16.mxu0 0
        %849 = vmatpush1.bf16.xpose.msra.mxu0 0
        %850 = vmatprep.mubr.bf16.mxu0 0
        %851 = vmatmul.mubr.bf16.gmra.mrb[0].mxu0 %v813
        %v852 = vpop.f32.mrb[0].mxu0
        %v853 = vadd.f32 0.0, %v852
        %v854 = vpop.f32.mrb[0].mxu0
        %v855 = vpop.f32.mrb[0].mxu0
        %v856 = vpop.f32.mrb[0].mxu0
        %857 = vdwg.mxu0
        %v858 = vlaneseq
        %v859 = vshrl.u32 %v858, 7
        %v860 = vlaneseq
        %v861 = vand.u32 %v860, 127
        %vm862 = vcmp.le.s32.totalorder %v861, %v859
        %v863 = vsel %vm862, %v853, -1e+30
        %v864 = vsel %vm788, %v863, -inf
        %865 = vmax.xlane.f32.xlu0 %v864
        %v866 = vpop.xlane.xlu0 %865
        %v867 = vsub.f32 %v863, %v866
        %v868 = vmul.f32 %v867, 1.442695
        %v869 = vpow.pop %v868
        %v870 = vsel %vm788, %v869, 0.0
        %871 = vadd.xlane.f32.xlu0 %v870
        %v872 = vpop.xlane.xlu0 %871
        %v873 = vrcp.pop %v872
        %v874 = vmul.f32 %v869, %v873
        %v875 = vpack.c.bf16 %v874, %v874
        %v877 = vsel %vm788, %v875, 0
        %vm879 = vcmask 1043456
        %v881 = vsel %vm879, %v759, 0
        %883 = vmatprep.subr.bf16.mxu0 0
        %884 = vmatpush1.bf16.msra.mxu0 %v881
        %885 = vmatprep.subr.bf16.mxu0 0
        %886 = vmatpush1.bf16.msra.mxu0 0
        %887 = vmatprep.subr.bf16.mxu0 0
        %888 = vmatpush1.bf16.msra.mxu0 0
        %889 = vmatprep.subr.bf16.mxu0 0
        %890 = vmatpush1.bf16.msra.mxu0 0
        %891 = vmatprep.subr.bf16.mxu0 0
        %892 = vmatpush1.bf16.msra.mxu0 0
        %893 = vmatprep.subr.bf16.mxu0 0
        %894 = vmatpush1.bf16.msra.mxu0 0
        %895 = vmatprep.subr.bf16.mxu0 0
        %896 = vmatpush1.bf16.msra.mxu0 0
        %897 = vmatprep.subr.bf16.mxu0 0
        %898 = vmatpush1.bf16.msra.mxu0 0
        %899 = vmatprep.subr.bf16.mxu0 0
        %900 = vmatpush1.bf16.msra.mxu0 0
        %901 = vmatprep.subr.bf16.mxu0 0
        %902 = vmatpush1.bf16.msra.mxu0 0
        %903 = vmatprep.subr.bf16.mxu0 0
        %904 = vmatpush1.bf16.msra.mxu0 0
        %905 = vmatprep.subr.bf16.mxu0 0
        %906 = vmatpush1.bf16.msra.mxu0 0
        %907 = vmatprep.subr.bf16.mxu0 0
        %908 = vmatpush1.bf16.msra.mxu0 0
        %909 = vmatprep.subr.bf16.mxu0 0
        %910 = vmatpush1.bf16.msra.mxu0 0
        %911 = vmatprep.subr.bf16.mxu0 0
        %912 = vmatpush1.bf16.msra.mxu0 0
        %913 = vmatprep.subr.bf16.mxu0 0
        %914 = vmatpush1.bf16.msra.mxu0 0
        %915 = vmatprep.mubr.bf16.mxu0 0
        %916 = vmatmul.mubr.bf16.gmra.mrb[0].mxu0 %v877
        %v917 = vpop.f32.mrb[0].mxu0
        %v918 = vadd.f32 0.0, %v917
        %v919 = vpop.f32.mrb[0].mxu0
        %v920 = vpop.f32.mrb[0].mxu0
        %v921 = vpop.f32.mrb[0].mxu0
        %922 = vdwg.mxu0
        %v923 = vpack.c.bf16 %v918, %v918
        %v924 = vld [vmem:[%s515] sm:$0xf]
        %v925 = vld [vmem:[%s515 + $0x4] sm:$0xf]
        %v928 = vunpack.c.l.b16 %v924
        %v929 = vunpack.c.l.b16 %v925
        %v930 = vpack.c.b16 %v929, %v928
        %v933 = vsel %vm811, %v923, 0
        %935 = vmatprep.subr.bf16.mxu0 0
        %936 = vmatpush1.bf16.msra.mxu0 %v930
        %937 = vmatprep.subr.bf16.mxu0 0
        %938 = vmatpush1.bf16.msra.mxu0 0
        %939 = vmatprep.subr.bf16.mxu0 0
        %940 = vmatpush1.bf16.msra.mxu0 0
        %941 = vmatprep.subr.bf16.mxu0 0
        %942 = vmatpush1.bf16.msra.mxu0 0
        %943 = vmatprep.subr.bf16.mxu0 0
        %944 = vmatpush1.bf16.msra.mxu0 0
        %945 = vmatprep.subr.bf16.mxu0 0
        %946 = vmatpush1.bf16.msra.mxu0 0
        %947 = vmatprep.subr.bf16.mxu0 0
        %948 = vmatpush1.bf16.msra.mxu0 0
        %949 = vmatprep.subr.bf16.mxu0 0
        %950 = vmatpush1.bf16.msra.mxu0 0
        %951 = vmatprep.subr.bf16.mxu0 0
        %952 = vmatpush1.bf16.msra.mxu0 0
        %953 = vmatprep.subr.bf16.mxu0 0
        %954 = vmatpush1.bf16.msra.mxu0 0
        %955 = vmatprep.subr.bf16.mxu0 0
        %956 = vmatpush1.bf16.msra.mxu0 0
        %957 = vmatprep.subr.bf16.mxu0 0
        %958 = vmatpush1.bf16.msra.mxu0 0
        %959 = vmatprep.subr.bf16.mxu0 0
        %960 = vmatpush1.bf16.msra.mxu0 0
        %961 = vmatprep.subr.bf16.mxu0 0
        %962 = vmatpush1.bf16.msra.mxu0 0
        %963 = vmatprep.subr.bf16.mxu0 0
        %964 = vmatpush1.bf16.msra.mxu0 0
        %965 = vmatprep.subr.bf16.mxu0 0
        %966 = vmatpush1.bf16.msra.mxu0 0
        %967 = vmatprep.mubr.bf16.mxu0 0
        %968 = vmatmul.mubr.bf16.gmra.mrb[0].mxu0 %v933
        %v969 = vpop.f32.mrb[0].mxu0
        %v970 = vadd.f32 0.0, %v969
        %v971 = vpop.f32.mrb[0].mxu0
        %v972 = vpop.f32.mrb[0].mxu0
        %v973 = vpop.f32.mrb[0].mxu0
        %974 = vdwg.mxu0
        %p975 = scmp.eq.s32.totalorder %s30, 0
        // Predicated region
        $region65: #{tpu_custom_call.1} parent=63 // pred_check
          %p976 = pneg %p975
        $region66: #{tpu_custom_call.1} parent=63 // pred_check_branch
          %978 = sbr.rel (%p976) target = $region68
        $region67: #{tpu_custom_call.1} parent=63 // pred_region
          %v979 = vld [vmem:[%s8] sm:$0x1]
          %v981 = vlaneseq
          %v982 = vshrl.u32 %v981, 7
          %v983 = vsub.s32 0, %v982
          %v984 = vrot.slane %v979, %v983
          %v986 = vadd.f32 %v970, %v984
          %987 = vst.msk [vmem:[%s482] sm:$0xff] %vm557, %v986
        $region68: #{tpu_custom_call.1} parent=63 // pred_fallthru
          _
        %p988 = scmp.ne.s32.totalorder %s30, 0
        // Predicated region
        $region69: #{tpu_custom_call.1} parent=63 // pred_check
          %p989 = pneg %p988
        $region70: #{tpu_custom_call.1} parent=63 // pred_check_branch
          %991 = sbr.rel (%p989) target = $region72
        $region71: #{tpu_custom_call.1} parent=63 // pred_region
          %v992 = vld [vmem:[%s482] sm:$0xff]
          %v993 = vadd.f32 %v992, %v970
          %994 = vst.msk [vmem:[%s482] sm:$0xff] %vm557, %v993
        $region72: #{tpu_custom_call.1} parent=63 // pred_fallthru
          _
        %s995 = sand.u32 %s316, 1
        %s996 = scalar_lea.sflag [#allocation3], %s995
        %s997 = sand.u32 %s316, 1
        %s998 = smul.addr %s997, 8
        %s999 = scalar_lea.vmem [#allocation2], %s998
        // Predicated region
        $region73: #{tpu_custom_call.1} parent=63 // pred_check
          %p1000 = pneg %p326
        $region74: #{tpu_custom_call.1} parent=63 // pred_check_branch
          %1002 = sbr.rel (%p1000) target = $region76
        $region75: #{tpu_custom_call.1} parent=63 // pred_region
          %s1004 = ssub.s32 128, 128
          %1005 = vsyncadd %s996, %s1004
          %s1006 = smul.addr %s29, 128
          %s1007 = scalar_lea.hbm %s11, %s1006
          %s1009 = sshll.u32 %s999, 4
          %s1010 = int_to_ptr.vmem [resolvable:$true] %s1009
          %1012 = dma.vmem_to_hbm [thread:$0]  %s1010, 128, %s1007, %s996
        $region76: #{tpu_custom_call.1} parent=63 // pred_fallthru
          _
      $region64: #{tpu_custom_call.1} parent=5 // pred_fallthru
        _
      %p1013 = scmp.le.s32.totalorder 2, %s20
      // Predicated region
      $region77: #{tpu_custom_call.1} parent=5 // pred_check
        %p1014 = pneg %p1013
      $region78: #{tpu_custom_call.1} parent=5 // pred_check_branch
        %1016 = sbr.rel (%p1014) target = $region80
      $region79: #{tpu_custom_call.1} parent=5 // pred_region
        %s1017 = ssub.s32 %s20, 2
        // Predicated region
        $region81: #{tpu_custom_call.1} parent=79 // pred_check
          %p1018 = pneg %p332
        $region82: #{tpu_custom_call.1} parent=79 // pred_check_branch
          %1020 = sbr.rel (%p1018) target = $region84
        $region83: #{tpu_custom_call.1} parent=79 // pred_region
          %s1021 = sand.u32 %s317, 1
          %s1022 = scalar_lea.sflag [#allocation3], %s1021
          %s1023 = sand.u32 %s317, 1
          %s1024 = smul.addr %s1023, 8
          %s1025 = scalar_lea.vmem [#allocation2], %s1024
          %1026 = dma.done %s1022, 128
        $region84: #{tpu_custom_call.1} parent=79 // pred_fallthru
          _
      $region80: #{tpu_custom_call.1} parent=5 // pred_fallthru
        _
    $region6: #{tpu_custom_call.1} parent=1 // loop_footer
      %s24 = sadd.s32 1, %s20
    $region7: #{tpu_custom_call.1} parent=1 // loop_footer_branch
      %19 = sbr.rel target = $region3
    $region8: #{tpu_custom_call.1} parent=1 // loop_exit
      _
    %1027 = vsyncpa [#allocation3], 1
    %s1028 = scalar_lea.sflag [#allocation3], 1
    %1029 = vsyncpa %s1028, 1

</llo_original>
